<compile_context>
chip_gen: v7x
topology: tpu7x:2x2x1
jax: 0.10.0
libtpu: 0.0.40
codegen_flags: <defaults>
</compile_context>

<pallas_src>
import numpy as np
import jax
import jax.numpy as jnp
from jax.experimental import pallas as pl
from jax.experimental.pallas import tpu as pltpu


# ----------------------------- config (small, Whisper-like) -----------------
SAMPLE_RATE = 16000
N_FFT = 256            # window / FFT size
HOP = 128              # hop length (N_FFT == 2 * HOP -> slice-based framing)
N_MELS = 16            # real mel bins
N_FREQ = N_FFT // 2 + 1        # 129 real-FFT bins
N_FREQ_KEEP = 128              # keep bins 1..128 (DC & Nyquist have zero mel weight)


# ----------------------------- deterministic "parameters" -------------------
def _hann_window(n):
    # periodic Hann, as torch.hann_window / HF window_function default
    return 0.5 * (1.0 - np.cos(2.0 * np.pi * np.arange(n) / n))


def _fused_dft_matrix():
    """Window-folded real-DFT for bins 1..128, cos|sin fused side-by-side: [N_FFT, 2*N_FREQ_KEEP]."""
    n = np.arange(N_FFT)[:, None].astype(np.float64)                  # [n_fft, 1]
    k = np.arange(1, N_FREQ_KEEP + 1)[None, :].astype(np.float64)     # [1, 128] bins 1..128
    ang = 2.0 * np.pi * n * k / N_FFT
    win = _hann_window(N_FFT)[:, None]
    cs = np.zeros((N_FFT, 2 * N_FREQ_KEEP), np.float32)
    cs[:, :N_FREQ_KEEP] = (win * np.cos(ang)).astype(np.float32)
    cs[:, N_FREQ_KEEP:] = (win * np.sin(ang)).astype(np.float32)
    return cs


def _mel_filterbank_t():
    """Slaney-scale, slaney-normalized mel filterbank, mel-major: [N_MELS, N_FREQ_KEEP]."""
    fmin, fmax = 0.0, SAMPLE_RATE / 2.0

    def hz_to_mel(f):
        f = np.asarray(f, dtype=np.float64)
        mels = f / (200.0 / 3.0)
        min_log_hz = 1000.0
        min_log_mel = min_log_hz / (200.0 / 3.0)
        logstep = np.log(6.4) / 27.0
        return np.where(f >= min_log_hz,
                        min_log_mel + np.log(np.maximum(f, 1e-10) / min_log_hz) / logstep,
                        mels)

    def mel_to_hz(m):
        m = np.asarray(m, dtype=np.float64)
        freqs = m * (200.0 / 3.0)
        min_log_hz = 1000.0
        min_log_mel = min_log_hz / (200.0 / 3.0)
        logstep = np.log(6.4) / 27.0
        return np.where(m >= min_log_mel,
                        min_log_hz * np.exp(logstep * (m - min_log_mel)),
                        freqs)

    fftfreqs = np.linspace(0.0, SAMPLE_RATE / 2.0, N_FREQ)
    mel_f = mel_to_hz(np.linspace(hz_to_mel(fmin), hz_to_mel(fmax), N_MELS + 2))
    fdiff = np.diff(mel_f)
    ramps = mel_f[:, None] - fftfreqs[None, :]
    lower = -ramps[:-2] / fdiff[:-1, None]
    upper = ramps[2:] / fdiff[1:, None]
    weights = np.maximum(0.0, np.minimum(lower, upper))               # [n_mels, n_freq]
    enorm = 2.0 / (mel_f[2:N_MELS + 2] - mel_f[:N_MELS])
    weights = weights * enorm[:, None]
    # DC (bin 0) and Nyquist (bin 128) rows are exactly zero for fmin=0 / fmax=sr/2,
    # so dropping them from the DFT/filterbank is lossless.
    assert not weights[:, 0].any() and not weights[:, -1].any()
    return weights[:, 1:1 + N_FREQ_KEEP].astype(np.float32)           # [N_MELS, 128]


# ----------------------------- Pallas kernel --------------------------------
def logmel_kernel(audio_ref, cs_ref, melT_ref, out_ref):
    # audio_ref: [1, F+1, HOP]            bf16  reflect-padded audio, one example
    # cs_ref:    [N_FFT, 2*N_FREQ_KEEP]   bf16  window-folded cos|sin real-DFT (bins 1..128)
    # melT_ref:  [N_MELS, N_FREQ_KEEP]    f32   mel filterbank, mel-major
    # out_ref:   [1, N_MELS, F]           f32   lane-dense along frames
    a = audio_ref[0].astype(jnp.float32)                              # [F+1, 128]

    # In-kernel framing: N_FFT == 2*HOP, so frame i = hop row i ++ hop row i+1.
    # Upcast first so the off-by-one sublane slice happens on f32 layout.
    frames = jnp.concatenate([a[:-1, :], a[1:, :]], axis=-1)          # [F, 256] f32
    frames = frames.astype(jnp.bfloat16)

    # Single fused STFT matmul; re/im recovered via free 128-aligned lane slices.
    y = jnp.dot(frames, cs_ref[...], preferred_element_type=jnp.float32)  # [F, 256]
    re = y[:, :N_FREQ_KEEP]
    im = y[:, N_FREQ_KEEP:]
    power = re * re + im * im                                         # f32 [F, 128]

    # Transpose to freq-major (XLU) and apply the small mel matmul in f32,
    # producing the mel-major [16, F] block directly.
    power_t = jnp.transpose(power)                                    # [128, F]
    mel = jnp.dot(melT_ref[...], power_t,
                  preferred_element_type=jnp.float32)                 # [16, F]

    log_spec = jnp.log10(jnp.maximum(mel, 1e-10))
    # Whisper dynamic-range clamp: per-example max over the real mel bins
    # (the kernel sees one full example per grid step, and only real mels here).
    mx = jnp.max(log_spec)
    out_ref[0] = (jnp.maximum(log_spec, mx - 8.0) + 4.0) * 0.25


# ----------------------------- wrapper ---------------------------------------
@jax.jit
def hf_wrapped_preprocessor(input_signal, length):
    """Forward pass of HFWrappedPreprocessor.

    input_signal: [B, T] float audio
    length:       [B]    int sample lengths (as in the reference, only its dtype
                         is used for the returned frame counts)
    returns (processed_signal [B, n_mels, n_frames], processed_signal_len [B])
    """
    B, T = input_signal.shape
    x = input_signal.astype(jnp.float32)

    # --- glue: center reflect-pad (torch.stft / Whisper style)
    pad = N_FFT // 2
    padded = jnp.pad(x, ((0, 0), (pad, pad)), mode="reflect")

    # Whisper drops the last STFT frame -> n_frames = T // HOP
    n_frames = T // HOP
    # TODO(synk): the HF Whisper extractor pads/truncates each example to 30 s
    # (480k samples); here frames are derived from the given T instead.

    # Kernel input: hop-sliced padded audio, bf16 to halve input DMA bytes.
    audio = padded[:, :(n_frames + 1) * HOP].reshape(B, n_frames + 1, HOP)
    audio = audio.astype(jnp.bfloat16)                                # [B, F+1, HOP]

    cs = jnp.asarray(_fused_dft_matrix(), dtype=jnp.bfloat16)         # [256, 256]
    mel_t = jnp.asarray(_mel_filterbank_t(), dtype=jnp.float32)       # [16, 128]

    out = pl.pallas_call(
        logmel_kernel,
        out_shape=jax.ShapeDtypeStruct((B, N_MELS, n_frames), jnp.float32),
        grid=(B,),
        in_specs=[
            pl.BlockSpec((1, n_frames + 1, HOP), lambda b: (b, 0, 0)),
            pl.BlockSpec((N_FFT, 2 * N_FREQ_KEEP), lambda b: (0, 0)),
            pl.BlockSpec((N_MELS, N_FREQ_KEEP), lambda b: (0, 0)),
        ],
        out_specs=pl.BlockSpec((1, N_MELS, n_frames), lambda b: (b, 0, 0)),
        compiler_params=pltpu.CompilerParams(
            dimension_semantics=("parallel",),
            # Safe on all of v5e/v6e/v7x (<= 64 MiB/TC physical on v7x); needed for
            # 30 s utterances which overflow the default scoped-VMEM budget.
            vmem_limit_bytes=48 * 1024 * 1024,
        ),
    )(audio, cs, mel_t)

    # Output is already [B, n_mels, n_frames]; just match the input dtype.
    processed_signal = out.astype(input_signal.dtype)
    # Reference wrapper semantics: constant per-example frame count in `length`'s dtype.
    processed_signal_len = jnp.full((B,), n_frames, dtype=length.dtype)
    return processed_signal, processed_signal_len


if __name__ == "__main__":
    key = jax.random.PRNGKey(0)
    B, T = 2, 2048
    input_signal = jax.random.normal(key, (B, T), dtype=jnp.float32)
    length = jnp.array([T, T - 448], dtype=jnp.int32)

    processed_signal, processed_signal_len = hf_wrapped_preprocessor(input_signal, length)
    jax.block_until_ready((processed_signal, processed_signal_len))

    assert processed_signal.shape == (B, N_MELS, T // HOP)
    assert processed_signal.dtype == input_signal.dtype
    assert processed_signal_len.shape == (B,)
    assert processed_signal_len.dtype == length.dtype
    assert bool(jnp.all(jnp.isfinite(processed_signal)))
    print("KERNEL_OK")
</pallas_src>

<mosaic_0001>
module attributes {stable_mosaic.version = 11 : i64} {
  func.func @logmel_kernel(%arg0: i32, %arg1: memref<1x17x128xbf16, #tpu.memory_space<vmem>>, %arg2: memref<256x256xbf16, #tpu.memory_space<vmem>>, %arg3: memref<16x128xf32, #tpu.memory_space<vmem>>, %arg4: memref<1x16x16xf32, #tpu.memory_space<vmem>>) attributes {dimension_semantics = [#tpu.dimension_semantics<parallel>], iteration_bounds = array<i64: 2>, scalar_prefetch = 0 : i64, scratch_operands = 0 : i64, tpu.core_type = #tpu.core_type<tc>, window_params = [{transform_indices = @transform_0, window_bounds = array<i64: 1, 17, 128>}, {pipeline_mode = #tpu.pipeline_mode<synchronous>, transform_indices = @transform_1, window_bounds = array<i64: 256, 256>}, {pipeline_mode = #tpu.pipeline_mode<synchronous>, transform_indices = @transform_2, window_bounds = array<i64: 16, 128>}, {transform_indices = @transform_3, window_bounds = array<i64: 1, 16, 16>}]} {
    %c0 = arith.constant 0 : index
    %c0_0 = arith.constant 0 : index
    %c0_1 = arith.constant 0 : index
    %0 = vector.load %arg1[%c0, %c0_0, %c0_1] : memref<1x17x128xbf16, #tpu.memory_space<vmem>>, vector<1x17x128xbf16>
    %1 = vector.shape_cast %0 : vector<1x17x128xbf16> to vector<17x128xbf16>
    %2 = arith.extf %1 : vector<17x128xbf16> to vector<17x128xf32>
    %3 = vector.extract_strided_slice %2 {offsets = [0, 0], sizes = [16, 128], strides = [1, 1]} : vector<17x128xf32> to vector<16x128xf32>
    %4 = vector.extract_strided_slice %2 {offsets = [1, 0], sizes = [16, 128], strides = [1, 1]} : vector<17x128xf32> to vector<16x128xf32>
    %5 = tpu.concatenate %3, %4 in 1 : vector<16x128xf32>, vector<16x128xf32> -> vector<16x256xf32>
    %6 = arith.truncf %5 : vector<16x256xf32> to vector<16x256xbf16>
    %c0_2 = arith.constant 0 : index
    %c0_3 = arith.constant 0 : index
    %7 = vector.load %arg2[%c0_2, %c0_3] : memref<256x256xbf16, #tpu.memory_space<vmem>>, vector<256x256xbf16>
    %cst = arith.constant dense<0.000000e+00> : vector<16x256xf32>
    %8 = tpu.matmul %6, %7, %cst {dimension_numbers = #tpu.dot_dimension_numbers<[1], [0], [0], [1], [0, 0, 1, 1], [], []>} : vector<16x256xbf16>, vector<256x256xbf16>, vector<16x256xf32> -> vector<16x256xf32>
    %9 = vector.extract_strided_slice %8 {offsets = [0, 0], sizes = [16, 128], strides = [1, 1]} : vector<16x256xf32> to vector<16x128xf32>
    %10 = vector.extract_strided_slice %8 {offsets = [0, 128], sizes = [16, 128], strides = [1, 1]} : vector<16x256xf32> to vector<16x128xf32>
    %11 = arith.mulf %9, %9 : vector<16x128xf32>
    %12 = arith.mulf %10, %10 : vector<16x128xf32>
    %13 = arith.addf %11, %12 : vector<16x128xf32>
    %14 = tpu.transpose %13, [1, 0] : vector<16x128xf32> -> vector<128x16xf32>
    %c0_4 = arith.constant 0 : index
    %c0_5 = arith.constant 0 : index
    %15 = vector.load %arg3[%c0_4, %c0_5] : memref<16x128xf32, #tpu.memory_space<vmem>>, vector<16x128xf32>
    %cst_6 = arith.constant dense<0.000000e+00> : vector<16x16xf32>
    %16 = tpu.matmul %15, %14, %cst_6 {dimension_numbers = #tpu.dot_dimension_numbers<[1], [0], [0], [1], [0, 0, 1, 1], [], []>} : vector<16x128xf32>, vector<128x16xf32>, vector<16x16xf32> -> vector<16x16xf32>
    %cst_7 = arith.constant 1.000000e-10 : f32
    %17 = vector.broadcast %cst_7 : f32 to vector<16x16xf32>
    %18 = arith.maximumf %16, %17 : vector<16x16xf32>
    %19 = math.log %18 : vector<16x16xf32>
    %cst_8 = arith.constant 0.434294492 : f32
    %20 = vector.broadcast %cst_8 : f32 to vector<16x16xf32>
    %21 = arith.mulf %19, %20 : vector<16x16xf32>
    %22 = vector.shape_cast %21 : vector<16x16xf32> to vector<1x16x16xf32>
    %cst_9 = arith.constant dense<0xFF800000> : vector<1xf32>
    %23 = vector.multi_reduction <maximumf>, %22, %cst_9 [1, 2] : vector<1x16x16xf32> to vector<1xf32>
    %24 = vector.shape_cast %23 : vector<1xf32> to vector<1x1x1xf32>
    %25 = vector.extract %24[0, 0, 0] : f32 from vector<1x1x1xf32>
    %cst_10 = arith.constant 8.000000e+00 : f32
    %26 = arith.subf %25, %cst_10 : f32
    %27 = vector.broadcast %26 : f32 to vector<16x16xf32>
    %28 = arith.maximumf %21, %27 : vector<16x16xf32>
    %cst_11 = arith.constant 4.000000e+00 : f32
    %29 = vector.broadcast %cst_11 : f32 to vector<16x16xf32>
    %30 = arith.addf %28, %29 : vector<16x16xf32>
    %cst_12 = arith.constant 2.500000e-01 : f32
    %31 = vector.broadcast %cst_12 : f32 to vector<16x16xf32>
    %32 = arith.mulf %30, %31 : vector<16x16xf32>
    %c0_13 = arith.constant 0 : index
    %c0_14 = arith.constant 0 : index
    %c0_15 = arith.constant 0 : index
    %33 = vector.load %arg4[%c0_13, %c0_14, %c0_15] : memref<1x16x16xf32, #tpu.memory_space<vmem>>, vector<1x16x16xf32>
    %34 = vector.shape_cast %33 : vector<1x16x16xf32> to vector<16x16xf32>
    %35 = vector.shape_cast %32 : vector<16x16xf32> to vector<1x16x16xf32>
    tpu.vector_store %arg4[%c0_13, %c0_14, %c0_15], %35 {strides = array<i32>} : memref<1x16x16xf32, #tpu.memory_space<vmem>>, vector<1x16x16xf32>,
    return
  }
  func.func @transform_0(%arg0: i32) -> (i32, i32, i32) {
    %c0_i32 = arith.constant 0 : i32
    %c0_i32_0 = arith.constant 0 : i32
    %c0_i32_1 = arith.constant 0 : i32
    return %arg0, %c0_i32, %c0_i32_0 : i32, i32, i32
  }
  func.func @transform_1(%arg0: i32) -> (i32, i32) {
    %c0_i32 = arith.constant 0 : i32
    %c0_i32_0 = arith.constant 0 : i32
    %c0_i32_1 = arith.constant 0 : i32
    return %c0_i32, %c0_i32_0 : i32, i32
  }
  func.func @transform_2(%arg0: i32) -> (i32, i32) {
    %c0_i32 = arith.constant 0 : i32
    %c0_i32_0 = arith.constant 0 : i32
    %c0_i32_1 = arith.constant 0 : i32
    return %c0_i32, %c0_i32_0 : i32, i32
  }
  func.func @transform_3(%arg0: i32) -> (i32, i32, i32) {
    %c0_i32 = arith.constant 0 : i32
    %c0_i32_0 = arith.constant 0 : i32
    %c0_i32_1 = arith.constant 0 : i32
    return %arg0, %c0_i32, %c0_i32_0 : i32, i32, i32
  }
}

</mosaic_0001>

<llo_original>
// kernel: hf_wrapped_preprocessor.1
$region0: #{hf_wrapped_preprocessor.1}
  #allocation0 [shape = 'u32[]', space=smem, size = 0x4, offset = 0x4, fixed_abs, tag = 'smem constant byte address 0x4 - core index']
  #allocation1 [shape = 'u32[144,128]{1,0:T(1,128)}', space=vmem, size = 0x12000, scoped, tag = 'internal scratch']
  %s0 = inlined_call_operand.vmem [shape: bf16[2,17,128], index: 0, kind: input, shape index: {}]
  %s1 = inlined_call_operand.vmem [shape: bf16[256,256], index: 1, kind: input, shape index: {}]
  %s2 = inlined_call_operand.vmem [shape: f32[16,128], index: 2, kind: input, shape index: {}]
  %s3 = inlined_call_operand.hbm [shape: f32[2,16,16], index: 3, kind: output, shape index: {}]
  %s4 = sld [smem:[#allocation0]]
  $region45: #{hf_wrapped_preprocessor.1} parent=0
    _
  %s6 = ssub.s32 1, %s4
  %s7 = scalar_select 0, %s6, %s4
  $region1: #{hf_wrapped_preprocessor.1} parent=0
    #allocation2 [shape = 'u8[16384]{0}', space=vmem, size = 0x4000, scoped, tag = 'output window, operand 0']
    #allocation3 [shape = 's32[2]{0}', space=sflag, size = 0x8, scoped, tag = 'scoped memory for hf_wrapped_preprocessor.1']
    %8 = vsyncpa [#allocation3], 0
    %s9 = scalar_lea.sflag [#allocation3], 1
    %10 = vsyncpa %s9, 0
    loop: start=0, step=1, limit=4
    $region2: #{hf_wrapped_preprocessor.1} parent=1 // loop_pre_header
      _
    $region3: #{hf_wrapped_preprocessor.1} parent=1 // loop_header
      %s12 = sphi 0, %s16
      %p13 = scmp.ge.s32.totalorder %s12, 4
      %s22 = sphi 0, %s24
      %s25 = sphi 0, %s22
      %s26 = sphi 0, %s25
      %s42 = sphi 0, %s26
      %s46 = sphi 0, %s46
      %s48 = sphi 0, %s46
      %s49 = sphi 0, %s48
      %s63 = sphi 0, %s49
      %s67 = sphi 0, %s67
      %s69 = sphi 0, %s67
      %s70 = sphi 0, %s69
      %s84 = sphi 0, %s70
      %s90 = sphi 0, %s92
      %s93 = sphi 0, %s90
      %s94 = sphi 0, %s93
      %s110 = sphi 0, %s94
    $region4: #{hf_wrapped_preprocessor.1} parent=1 // loop_header_branch
      %15 = sbr.rel (%p13) target = $region8
    $region5: #{hf_wrapped_preprocessor.1} parent=1 // loop_body
      %s17 = ssub.s32 %s12, 1
      %s18 = ssub.s32 %s12, 2
      %s19 = sadd.s32 %s12, 1
      %s20 = ssub.s32 %s12, %s19
      %p21 = scmp.eq.s32.totalorder %s20, 0
      %s23 = sadd.s32 %s22, 1
      %s24 = scalar_select %p21, %s22, %s23
      %p27 = pneg %p21
      %p28 = scmp.eq.s32.totalorder %s12, 1
      %p29 = por %p27, %p28
      %p30 = scmp.ne.s32.totalorder %s22, %s25
      %p31 = scmp.eq.s32.totalorder %s12, 0
      %p32 = por %p30, %p31
      %p33 = scmp.ne.s32.totalorder %s22, %s25
      %p34 = scmp.eq.s32.totalorder %s17, 1
      %p35 = por %p33, %p34
      %p36 = scmp.ne.s32.totalorder %s25, %s26
      %p37 = scmp.eq.s32.totalorder %s17, 0
      %p38 = por %p36, %p37
      %p39 = scmp.ne.s32.totalorder %s25, %s26
      %p40 = scmp.eq.s32.totalorder %s18, 1
      %p41 = por %p39, %p40
      %p43 = scmp.ne.s32.totalorder %s26, %s42
      %p44 = scmp.eq.s32.totalorder %s18, 0
      %p45 = por %p43, %p44
      %s47 = sadd.s32 %s46, 1
      %p50 = scmp.eq.s32.totalorder %s12, 1
      %p51 = scmp.ne.s32.totalorder %s46, %s48
      %p52 = scmp.eq.s32.totalorder %s12, 0
      %p53 = por %p51, %p52
      %p54 = scmp.ne.s32.totalorder %s46, %s48
      %p55 = scmp.eq.s32.totalorder %s17, 1
      %p56 = por %p54, %p55
      %p57 = scmp.ne.s32.totalorder %s48, %s49
      %p58 = scmp.eq.s32.totalorder %s17, 0
      %p59 = por %p57, %p58
      %p60 = scmp.ne.s32.totalorder %s48, %s49
      %p61 = scmp.eq.s32.totalorder %s18, 1
      %p62 = por %p60, %p61
      %p64 = scmp.ne.s32.totalorder %s49, %s63
      %p65 = scmp.eq.s32.totalorder %s18, 0
      %p66 = por %p64, %p65
      %s68 = sadd.s32 %s67, 1
      %p71 = scmp.eq.s32.totalorder %s12, 1
      %p72 = scmp.ne.s32.totalorder %s67, %s69
      %p73 = scmp.eq.s32.totalorder %s12, 0
      %p74 = por %p72, %p73
      %p75 = scmp.ne.s32.totalorder %s67, %s69
      %p76 = scmp.eq.s32.totalorder %s17, 1
      %p77 = por %p75, %p76
      %p78 = scmp.ne.s32.totalorder %s69, %s70
      %p79 = scmp.eq.s32.totalorder %s17, 0
      %p80 = por %p78, %p79
      %p81 = scmp.ne.s32.totalorder %s69, %s70
      %p82 = scmp.eq.s32.totalorder %s18, 1
      %p83 = por %p81, %p82
      %p85 = scmp.ne.s32.totalorder %s70, %s84
      %p86 = scmp.eq.s32.totalorder %s18, 0
      %p87 = por %p85, %p86
      %s88 = ssub.s32 %s12, %s19
      %p89 = scmp.eq.s32.totalorder %s88, 0
      %s91 = sadd.s32 %s90, 1
      %s92 = scalar_select %p89, %s90, %s91
      %p95 = pneg %p89
      %p96 = scmp.eq.s32.totalorder %s12, 1
      %p97 = por %p95, %p96
      %p98 = scmp.ne.s32.totalorder %s90, %s93
      %p99 = scmp.eq.s32.totalorder %s12, 0
      %p100 = por %p98, %p99
      %p101 = scmp.ne.s32.totalorder %s90, %s93
      %p102 = scmp.eq.s32.totalorder %s17, 1
      %p103 = por %p101, %p102
      %p104 = scmp.ne.s32.totalorder %s93, %s94
      %p105 = scmp.eq.s32.totalorder %s17, 0
      %p106 = por %p104, %p105
      %p107 = scmp.ne.s32.totalorder %s93, %s94
      %p108 = scmp.eq.s32.totalorder %s18, 1
      %p109 = por %p107, %p108
      %p111 = scmp.ne.s32.totalorder %s94, %s110
      %p112 = scmp.eq.s32.totalorder %s18, 0
      %p113 = por %p111, %p112
      %p114 = scmp.le.s32.totalorder 1, %s12
      %p115 = scmp.lt.s32.totalorder %s12, 3
      %p116 = pnand %p114, %p115
      %p117 = pneg %p116
      // Predicated region
      $region9: #{hf_wrapped_preprocessor.1} parent=5 // pred_check
        _
      $region10: #{hf_wrapped_preprocessor.1} parent=5 // pred_check_branch
        %119 = sbr.rel (%p116) target = $region12
      $region11: #{hf_wrapped_preprocessor.1} parent=5 // pred_region
        %s120 = ssub.s32 %s12, 1
        // Predicated region
        $region13: #{hf_wrapped_preprocessor.1} parent=11 // pred_check
          %p121 = pneg %p59
        $region14: #{hf_wrapped_preprocessor.1} parent=11 // pred_check_branch
          %123 = sbr.rel (%p121) target = $region16
        $region15: #{hf_wrapped_preprocessor.1} parent=11 // pred_region
          _
        $region16: #{hf_wrapped_preprocessor.1} parent=11 // pred_fallthru
          _
        // Predicated region
        $region17: #{hf_wrapped_preprocessor.1} parent=11 // pred_check
          %p124 = pneg %p80
        $region18: #{hf_wrapped_preprocessor.1} parent=11 // pred_check_branch
          %126 = sbr.rel (%p124) target = $region20
        $region19: #{hf_wrapped_preprocessor.1} parent=11 // pred_region
          _
        $region20: #{hf_wrapped_preprocessor.1} parent=11 // pred_fallthru
          _
      $region12: #{hf_wrapped_preprocessor.1} parent=5 // pred_fallthru
        _
      %p127 = scmp.lt.s32.totalorder %s12, 2
      // Predicated region
      $region21: #{hf_wrapped_preprocessor.1} parent=5 // pred_check
        %p128 = pneg %p127
      $region22: #{hf_wrapped_preprocessor.1} parent=5 // pred_check_branch
        %130 = sbr.rel (%p128) target = $region24
      $region23: #{hf_wrapped_preprocessor.1} parent=5 // pred_region
        // Predicated region
        $region25: #{hf_wrapped_preprocessor.1} parent=23 // pred_check
          %p131 = pneg %p32
        $region26: #{hf_wrapped_preprocessor.1} parent=23 // pred_check_branch
          %133 = sbr.rel (%p131) target = $region28
        $region27: #{hf_wrapped_preprocessor.1} parent=23 // pred_region
          %p134 = scmp.lt.s32.totalorder %s12, 1
          %s135 = scalar_select %p134, %s12, 1
          %s136 = smul.addr %s135, 3
          %s137 = smul.addr %s136, 4
          %s138 = scalar_lea.vmem %s0, %s137
        $region28: #{hf_wrapped_preprocessor.1} parent=23 // pred_fallthru
          _
      $region24: #{hf_wrapped_preprocessor.1} parent=5 // pred_fallthru
        _
      %p139 = scmp.le.s32.totalorder 1, %s12
      %p140 = scmp.lt.s32.totalorder %s12, 3
      %p141 = pnand %p139, %p140
      %p142 = pneg %p141
      // Predicated region
      $region29: #{hf_wrapped_preprocessor.1} parent=5 // pred_check
        _
      $region30: #{hf_wrapped_preprocessor.1} parent=5 // pred_check_branch
        %144 = sbr.rel (%p141) target = $region32
      $region31: #{hf_wrapped_preprocessor.1} parent=5 // pred_region
        %s145 = ssub.s32 %s12, 1
        %p146 = scmp.lt.s32.totalorder %s17, 1
        %s147 = scalar_select %p146, %s17, 1
        %s148 = smul.addr %s147, 3
        %s149 = smul.addr %s148, 4
        %s150 = scalar_lea.vmem %s0, %s149
        %p151 = pneg %p38
        %p152 = pneg %p35
        %p153 = pneg %p59
        %p154 = pneg %p56
        %p155 = pneg %p80
        %p156 = pneg %p77
        %p157 = pneg %p106
        %p158 = pneg %p103
        %s159 = sand.u32 %s93, 1
        %s160 = scalar_lea.sflag [#allocation3], %s159
        %s161 = sand.u32 %s93, 1
        %s162 = smul.addr %s161, 16
        %s163 = scalar_lea.vmem [#allocation2], %s162
        %p164 = scmp.lt.s32.totalorder %s17, 1
        %s165 = scalar_select %p164, %s17, 1
        %s166 = smul.addr %s165, 3
        %s167 = smul.addr %s166, 4
        %s168 = scalar_lea.vmem %s0, %s167
        %v169 = vld [vmem:[%s168] sm:$0xf]
        %v170 = vld [vmem:[%s168 + $0x4] sm:$0xf]
        %v171 = vld [vmem:[%s168 + $0x8] sm:$0x1]
        %v172 = vunpack.c.l.bf16 %v169
        %v173 = vunpack.c.l.bf16 %v170
        %v174 = vunpack.c.l.bf16 %v171
        %vm178 = vcmask 1046528
        %v179 = vrot.slane %v172, 1
        %v180 = vrot.slane %v173, 1
        %v181 = vsel %vm178, %v179, %v180
        %v182 = vrot.slane %v174, 1
        %v183 = vsel %vm178, %v180, %v182
        %v186 = vpack.c.bf16 %v173, %v172
        %v187 = vpack.c.bf16 %v183, %v181
        %v188 = vld [vmem:[%s1] sm:$0xff]
        %v189 = vld [vmem:[%s1 + $0x8] sm:$0xff]
        %v190 = vld [vmem:[%s1 + $0x10] sm:$0xff]
        %v191 = vld [vmem:[%s1 + $0x18] sm:$0xff]
        %v192 = vld [vmem:[%s1 + $0x20] sm:$0xff]
        %v193 = vld [vmem:[%s1 + $0x28] sm:$0xff]
        %v194 = vld [vmem:[%s1 + $0x30] sm:$0xff]
        %v195 = vld [vmem:[%s1 + $0x38] sm:$0xff]
        %v196 = vld [vmem:[%s1 + $0x40] sm:$0xff]
        %v197 = vld [vmem:[%s1 + $0x48] sm:$0xff]
        %v198 = vld [vmem:[%s1 + $0x50] sm:$0xff]
        %v199 = vld [vmem:[%s1 + $0x58] sm:$0xff]
        %v200 = vld [vmem:[%s1 + $0x60] sm:$0xff]
        %v201 = vld [vmem:[%s1 + $0x68] sm:$0xff]
        %v202 = vld [vmem:[%s1 + $0x70] sm:$0xff]
        %v203 = vld [vmem:[%s1 + $0x78] sm:$0xff]
        %v204 = vld [vmem:[%s1 + $0x80] sm:$0xff]
        %v205 = vld [vmem:[%s1 + $0x88] sm:$0xff]
        %v206 = vld [vmem:[%s1 + $0x90] sm:$0xff]
        %v207 = vld [vmem:[%s1 + $0x98] sm:$0xff]
        %v208 = vld [vmem:[%s1 + $0xa0] sm:$0xff]
        %v209 = vld [vmem:[%s1 + $0xa8] sm:$0xff]
        %v210 = vld [vmem:[%s1 + $0xb0] sm:$0xff]
        %v211 = vld [vmem:[%s1 + $0xb8] sm:$0xff]
        %v212 = vld [vmem:[%s1 + $0xc0] sm:$0xff]
        %v213 = vld [vmem:[%s1 + $0xc8] sm:$0xff]
        %v214 = vld [vmem:[%s1 + $0xd0] sm:$0xff]
        %v215 = vld [vmem:[%s1 + $0xd8] sm:$0xff]
        %v216 = vld [vmem:[%s1 + $0xe0] sm:$0xff]
        %v217 = vld [vmem:[%s1 + $0xe8] sm:$0xff]
        %v218 = vld [vmem:[%s1 + $0xf0] sm:$0xff]
        %v219 = vld [vmem:[%s1 + $0xf8] sm:$0xff]
        %v252 = vunpack.c.l.b16 %v188
        %v253 = vunpack.c.h.b16 %v188
        %v254 = vunpack.c.l.b16 %v189
        %v255 = vunpack.c.h.b16 %v189
        %v256 = vunpack.c.l.b16 %v190
        %v257 = vunpack.c.h.b16 %v190
        %v258 = vunpack.c.l.b16 %v191
        %v259 = vunpack.c.h.b16 %v191
        %v260 = vunpack.c.l.b16 %v192
        %v261 = vunpack.c.h.b16 %v192
        %v262 = vunpack.c.l.b16 %v193
        %v263 = vunpack.c.h.b16 %v193
        %v264 = vunpack.c.l.b16 %v194
        %v265 = vunpack.c.h.b16 %v194
        %v266 = vunpack.c.l.b16 %v195
        %v267 = vunpack.c.h.b16 %v195
        %v268 = vunpack.c.l.b16 %v196
        %v269 = vunpack.c.h.b16 %v196
        %v270 = vunpack.c.l.b16 %v197
        %v271 = vunpack.c.h.b16 %v197
        %v272 = vunpack.c.l.b16 %v198
        %v273 = vunpack.c.h.b16 %v198
        %v274 = vunpack.c.l.b16 %v199
        %v275 = vunpack.c.h.b16 %v199
        %v276 = vunpack.c.l.b16 %v200
        %v277 = vunpack.c.h.b16 %v200
        %v278 = vunpack.c.l.b16 %v201
        %v279 = vunpack.c.h.b16 %v201
        %v280 = vunpack.c.l.b16 %v202
        %v281 = vunpack.c.h.b16 %v202
        %v282 = vunpack.c.l.b16 %v203
        %v283 = vunpack.c.h.b16 %v203
        %v284 = vunpack.c.l.b16 %v204
        %v285 = vunpack.c.h.b16 %v204
        %v286 = vunpack.c.l.b16 %v205
        %v287 = vunpack.c.h.b16 %v205
        %v288 = vunpack.c.l.b16 %v206
        %v289 = vunpack.c.h.b16 %v206
        %v290 = vunpack.c.l.b16 %v207
        %v291 = vunpack.c.h.b16 %v207
        %v292 = vunpack.c.l.b16 %v208
        %v293 = vunpack.c.h.b16 %v208
        %v294 = vunpack.c.l.b16 %v209
        %v295 = vunpack.c.h.b16 %v209
        %v296 = vunpack.c.l.b16 %v210
        %v297 = vunpack.c.h.b16 %v210
        %v298 = vunpack.c.l.b16 %v211
        %v299 = vunpack.c.h.b16 %v211
        %v300 = vunpack.c.l.b16 %v212
        %v301 = vunpack.c.h.b16 %v212
        %v302 = vunpack.c.l.b16 %v213
        %v303 = vunpack.c.h.b16 %v213
        %v304 = vunpack.c.l.b16 %v214
        %v305 = vunpack.c.h.b16 %v214
        %v306 = vunpack.c.l.b16 %v215
        %v307 = vunpack.c.h.b16 %v215
        %v308 = vunpack.c.l.b16 %v216
        %v309 = vunpack.c.h.b16 %v216
        %v310 = vunpack.c.l.b16 %v217
        %v311 = vunpack.c.h.b16 %v217
        %v312 = vunpack.c.l.b16 %v218
        %v313 = vunpack.c.h.b16 %v218
        %v314 = vunpack.c.l.b16 %v219
        %v315 = vunpack.c.h.b16 %v219
        %v316 = vpack.c.b16 %v254, %v252
        %v317 = vpack.c.b16 %v255, %v253
        %v318 = vpack.c.b16 %v258, %v256
        %v319 = vpack.c.b16 %v259, %v257
        %v320 = vpack.c.b16 %v262, %v260
        %v321 = vpack.c.b16 %v263, %v261
        %v322 = vpack.c.b16 %v266, %v264
        %v323 = vpack.c.b16 %v267, %v265
        %v324 = vpack.c.b16 %v270, %v268
        %v325 = vpack.c.b16 %v271, %v269
        %v326 = vpack.c.b16 %v274, %v272
        %v327 = vpack.c.b16 %v275, %v273
        %v328 = vpack.c.b16 %v278, %v276
        %v329 = vpack.c.b16 %v279, %v277
        %v330 = vpack.c.b16 %v282, %v280
        %v331 = vpack.c.b16 %v283, %v281
        %v332 = vpack.c.b16 %v286, %v284
        %v333 = vpack.c.b16 %v287, %v285
        %v334 = vpack.c.b16 %v290, %v288
        %v335 = vpack.c.b16 %v291, %v289
        %v336 = vpack.c.b16 %v294, %v292
        %v337 = vpack.c.b16 %v295, %v293
        %v338 = vpack.c.b16 %v298, %v296
        %v339 = vpack.c.b16 %v299, %v297
        %v340 = vpack.c.b16 %v302, %v300
        %v341 = vpack.c.b16 %v303, %v301
        %v342 = vpack.c.b16 %v306, %v304
        %v343 = vpack.c.b16 %v307, %v305
        %v344 = vpack.c.b16 %v310, %v308
        %v345 = vpack.c.b16 %v311, %v309
        %v346 = vpack.c.b16 %v314, %v312
        %v347 = vpack.c.b16 %v315, %v313
        %380 = vmatprep.subr.bf16.mxu0 %v317
        %381 = vmatpush1.bf16.msra.mxu0 %v316
        %382 = vmatprep.subr.bf16.mxu0 %v319
        %383 = vmatpush1.bf16.msra.mxu0 %v318
        %384 = vmatprep.subr.bf16.mxu0 %v321
        %385 = vmatpush1.bf16.msra.mxu0 %v320
        %386 = vmatprep.subr.bf16.mxu0 %v323
        %387 = vmatpush1.bf16.msra.mxu0 %v322
        %388 = vmatprep.subr.bf16.mxu0 %v325
        %389 = vmatpush1.bf16.msra.mxu0 %v324
        %390 = vmatprep.subr.bf16.mxu0 %v327
        %391 = vmatpush1.bf16.msra.mxu0 %v326
        %392 = vmatprep.subr.bf16.mxu0 %v329
        %393 = vmatpush1.bf16.msra.mxu0 %v328
        %394 = vmatprep.subr.bf16.mxu0 %v331
        %395 = vmatpush1.bf16.msra.mxu0 %v330
        %396 = vmatprep.subr.bf16.mxu0 %v333
        %397 = vmatpush1.bf16.msra.mxu0 %v332
        %398 = vmatprep.subr.bf16.mxu0 %v335
        %399 = vmatpush1.bf16.msra.mxu0 %v334
        %400 = vmatprep.subr.bf16.mxu0 %v337
        %401 = vmatpush1.bf16.msra.mxu0 %v336
        %402 = vmatprep.subr.bf16.mxu0 %v339
        %403 = vmatpush1.bf16.msra.mxu0 %v338
        %404 = vmatprep.subr.bf16.mxu0 %v341
        %405 = vmatpush1.bf16.msra.mxu0 %v340
        %406 = vmatprep.subr.bf16.mxu0 %v343
        %407 = vmatpush1.bf16.msra.mxu0 %v342
        %408 = vmatprep.subr.bf16.mxu0 %v345
        %409 = vmatpush1.bf16.msra.mxu0 %v344
        %410 = vmatprep.subr.bf16.mxu0 %v347
        %411 = vmatpush1.bf16.msra.mxu0 %v346
        %412 = vmatprep.mubr.bf16.mxu0 %v187
        %413 = vmatmul.mubr.bf16.gmra.mrb[0].mxu0 %v186
        %v414 = vpop.f32.mrb[0].mxu0
        %v415 = vadd.f32 0.0, %v414
        %v416 = vpop.f32.mrb[0].mxu0
        %v417 = vadd.f32 0.0, %v416
        %v418 = vpop.f32.mrb[0].mxu0
        %v419 = vadd.f32 0.0, %v418
        %v420 = vpop.f32.mrb[0].mxu0
        %v421 = vadd.f32 0.0, %v420
        %422 = vdwg.mxu0
        %v423 = vmul.f32 %v415, %v415
        %v424 = vmul.f32 %v419, %v419
        %v425 = vmul.f32 %v417, %v417
        %v426 = vmul.f32 %v421, %v421
        %v427 = vadd.f32 %v423, %v425
        %v428 = vadd.f32 %v424, %v426
        %v429 = vld [vmem:[%s2] sm:$0xff]
        %v430 = vld [vmem:[%s2 + $0x8] sm:$0xff]
        %431 = vmatprep.subr.mxu0 0.0
        %432 = vmatpush1.xpose.msra.mxu0 %v427
        %433 = vmatprep.subr.mxu0 0.0
        %434 = vmatpush1.xpose.msra.mxu0 %v428
        %435 = vmatprep.subr.mxu0 0.0
        %436 = vmatpush1.xpose.msra.mxu0 0.0
        %437 = vmatprep.subr.mxu0 0.0
        %438 = vmatpush1.xpose.msra.mxu0 0.0
        %439 = vmatprep.subr.mxu0 0.0
        %440 = vmatpush1.xpose.msra.mxu0 0.0
        %441 = vmatprep.subr.mxu0 0.0
        %442 = vmatpush1.xpose.msra.mxu0 0.0
        %443 = vmatprep.subr.mxu0 0.0
        %444 = vmatpush1.xpose.msra.mxu0 0.0
        %445 = vmatprep.subr.mxu0 0.0
        %446 = vmatpush1.xpose.msra.mxu0 0.0
        %447 = vmatprep.subr.mxu0 0.0
        %448 = vmatpush1.xpose.msra.mxu0 0.0
        %449 = vmatprep.subr.mxu0 0.0
        %450 = vmatpush1.xpose.msra.mxu0 0.0
        %451 = vmatprep.subr.mxu0 0.0
        %452 = vmatpush1.xpose.msra.mxu0 0.0
        %453 = vmatprep.subr.mxu0 0.0
        %454 = vmatpush1.xpose.msra.mxu0 0.0
        %455 = vmatprep.subr.mxu0 0.0
        %456 = vmatpush1.xpose.msra.mxu0 0.0
        %457 = vmatprep.subr.mxu0 0.0
        %458 = vmatpush1.xpose.msra.mxu0 0.0
        %459 = vmatprep.subr.mxu0 0.0
        %460 = vmatpush1.xpose.msra.mxu0 0.0
        %461 = vmatprep.subr.mxu0 0.0
        %462 = vmatpush1.xpose.msra.mxu0 0.0
        %463 = vmatprep.subr.mxu0 0.0
        %464 = vmatpush1.xpose.msra.mxu0 0.0
        %465 = vmatprep.subr.mxu0 0.0
        %466 = vmatpush1.xpose.msra.mxu0 0.0
        %467 = vmatprep.subr.mxu0 0.0
        %468 = vmatpush1.xpose.msra.mxu0 0.0
        %469 = vmatprep.subr.mxu0 0.0
        %470 = vmatpush1.xpose.msra.mxu0 0.0
        %471 = vmatprep.subr.mxu0 0.0
        %472 = vmatpush1.xpose.msra.mxu0 0.0
        %473 = vmatprep.subr.mxu0 0.0
        %474 = vmatpush1.xpose.msra.mxu0 0.0
        %475 = vmatprep.subr.mxu0 0.0
        %476 = vmatpush1.xpose.msra.mxu0 0.0
        %477 = vmatprep.subr.mxu0 0.0
        %478 = vmatpush1.xpose.msra.mxu0 0.0
        %479 = vmatprep.subr.mxu0 0.0
        %480 = vmatpush1.xpose.msra.mxu0 0.0
        %481 = vmatprep.subr.mxu0 0.0
        %482 = vmatpush1.xpose.msra.mxu0 0.0
        %483 = vmatprep.subr.mxu0 0.0
        %484 = vmatpush1.xpose.msra.mxu0 0.0
        %485 = vmatprep.subr.mxu0 0.0
        %486 = vmatpush1.xpose.msra.mxu0 0.0
        %487 = vmatprep.subr.mxu0 0.0
        %488 = vmatpush1.xpose.msra.mxu0 0.0
        %489 = vmatprep.subr.mxu0 0.0
        %490 = vmatpush1.xpose.msra.mxu0 0.0
        %491 = vmatprep.subr.mxu0 0.0
        %492 = vmatpush1.xpose.msra.mxu0 0.0
        %493 = vmatprep.subr.mxu0 0.0
        %494 = vmatpush1.xpose.msra.mxu0 0.0
        %495 = vmatprep.mubr.f32.mxu0 0.0
        %496 = vmatmul.mubr.f32.gmra.mrb[0].mxu0 %v429
        %v497 = vpop.f32.mrb[0].mxu0
        %v498 = vadd.f32 0.0, %v497
        %v499 = vpop.f32.mrb[0].mxu0
        %500 = vmatprep.mubr.f32.mxu0 0.0
        %501 = vmatmul.mubr.f32.gmra.mrb[0].mxu0 %v430
        %v502 = vpop.f32.mrb[0].mxu0
        %v503 = vadd.f32 0.0, %v502
        %v504 = vpop.f32.mrb[0].mxu0
        %505 = vdwg.mxu0
        %v506 = vmax.f32 %v498, 1e-10
        %v507 = vmax.f32 %v503, 1e-10
        %v508 = vlog2.pop %v506
        %v509 = vmul.f32 %v508, 0.6931472
        %v510 = vlog2.pop %v507
        %v511 = vmul.f32 %v510, 0.6931472
        %v512 = vmul.f32 %v509, 0.4342945
        %v513 = vmul.f32 %v511, 0.4342945
        %vm514 = vcmask 130048
        %v515 = vsel %vm514, %v512, -inf
        %v516 = vsel %vm514, %v513, -inf
        %v517 = vmax.f32 %v515, %v516
        %518 = vmax.xlane.f32.xlu0 %v517
        %v519 = vpop.xlane.xlu0 %518
        %v520 = vrot.slane %v519, 4
        %v521 = vmax.f32 %v519, %v520
        %v522 = vrot.slane %v521, 2
        %v523 = vmax.f32 %v521, %v522
        %v524 = vrot.slane %v523, 1
        %v525 = vmax.f32 %v523, %v524
        %s526 = vtos %v525
        %s527 = ssub.f32 %s526, 8.0
        %v528 = vstv %s527
        %v529 = vmax.f32 %v512, %v528
        %v530 = vmax.f32 %v513, %v528
        %v531 = vadd.f32 %v529, 4.0
        %v532 = vadd.f32 %v530, 4.0
        %v533 = vmul.f32 %v531, 0.25
        %v534 = vmul.f32 %v532, 0.25
        %535 = vst.msk [vmem:[%s163] sm:$0xff] %vm514, %v533
        %536 = vst.msk [vmem:[%s163 + $0x8] sm:$0xff] %vm514, %v534
        %s537 = sand.u32 %s93, 1
        %s538 = scalar_lea.sflag [#allocation3], %s537
        %s539 = sand.u32 %s93, 1
        %s540 = smul.addr %s539, 16
        %s541 = scalar_lea.vmem [#allocation2], %s540
        // Predicated region
        $region33: #{hf_wrapped_preprocessor.1} parent=31 // pred_check
          %p542 = pneg %p103
        $region34: #{hf_wrapped_preprocessor.1} parent=31 // pred_check_branch
          %544 = sbr.rel (%p542) target = $region36
        $region35: #{hf_wrapped_preprocessor.1} parent=31 // pred_region
          %s546 = ssub.s32 256, 256
          %547 = vsyncadd %s538, %s546
          %s548 = smul.addr %s17, 2
          %s549 = smul.addr %s548, 128
          %s550 = scalar_lea.hbm %s3, %s549
          %s551 = sshll.u32 %s541, 4
          %s552 = int_to_ptr.vmem [resolvable:$true] %s551
          %557 = dma.vmem_to_hbm [thread:$0]  %s552, 256, %s550, %s538, 128, 128, 8
        $region36: #{hf_wrapped_preprocessor.1} parent=31 // pred_fallthru
          _
      $region32: #{hf_wrapped_preprocessor.1} parent=5 // pred_fallthru
        _
      %p558 = scmp.le.s32.totalorder 2, %s12
      // Predicated region
      $region37: #{hf_wrapped_preprocessor.1} parent=5 // pred_check
        %p559 = pneg %p558
      $region38: #{hf_wrapped_preprocessor.1} parent=5 // pred_check_branch
        %561 = sbr.rel (%p559) target = $region40
      $region39: #{hf_wrapped_preprocessor.1} parent=5 // pred_region
        %s562 = ssub.s32 %s12, 2
        // Predicated region
        $region41: #{hf_wrapped_preprocessor.1} parent=39 // pred_check
          %p563 = pneg %p109
        $region42: #{hf_wrapped_preprocessor.1} parent=39 // pred_check_branch
          %565 = sbr.rel (%p563) target = $region44
        $region43: #{hf_wrapped_preprocessor.1} parent=39 // pred_region
          %s566 = sand.u32 %s94, 1
          %s567 = scalar_lea.sflag [#allocation3], %s566
          %s568 = sand.u32 %s94, 1
          %s569 = smul.addr %s568, 16
          %s570 = scalar_lea.vmem [#allocation2], %s569
          %571 = dma.done %s567, 256
        $region44: #{hf_wrapped_preprocessor.1} parent=39 // pred_fallthru
          _
      $region40: #{hf_wrapped_preprocessor.1} parent=5 // pred_fallthru
        _
    $region6: #{hf_wrapped_preprocessor.1} parent=1 // loop_footer
      %s16 = sadd.s32 1, %s12
    $region7: #{hf_wrapped_preprocessor.1} parent=1 // loop_footer_branch
      %11 = sbr.rel target = $region3
    $region8: #{hf_wrapped_preprocessor.1} parent=1 // loop_exit
      _
    %572 = vsyncpa [#allocation3], 1
    %s573 = scalar_lea.sflag [#allocation3], 1
    %574 = vsyncpa %s573, 1

</llo_original>
